<compile_context>
chip_gen: v5e
topology: v5e:2x2
jax: 0.10.0
libtpu: 0.0.40
codegen_flags: <defaults>
</compile_context>

<pallas_src>
import jax
import jax.numpy as jnp
from jax.experimental import pallas as pl
from jax.experimental.pallas import tpu as pltpu

_LANE = 128       # TPU lane width
_SUBLANE = 8      # f32 sublane count
_H1 = 128         # hidden layer 1 width
_H2 = 64          # hidden layer 2 width (padded to 128 lanes inside the kernel)
_H2_PAD = 128     # lane-dense padded hidden-2 width


def _round_up(n, m):
    return ((n + m - 1) // m) * m


def _mlp_kernel(x_ref, w1_ref, b1_ref, w2_ref, b2_ref, w3_ref, b3_ref, o_ref):
    # x_ref: (TB, in) f32; weights pre-transposed to (in, out) in compute dtype;
    # biases (1, out) f32; output tile (TB, A) f32 (unpadded action head).
    x = x_ref[...].astype(w1_ref.dtype)   # in-kernel f32 -> bf16 cast (free)

    # Layer 1: Linear + ReLU (MXU matmul, f32 accumulate)
    h1 = jnp.dot(x, w1_ref[...], preferred_element_type=jnp.float32) + b1_ref[...]
    h1 = jnp.maximum(h1, 0.0).astype(w2_ref.dtype)

    # Layer 2: Linear + ReLU (output lanes 64:128 are zero-padded -> stay zero)
    h2 = jnp.dot(h1, w2_ref[...], preferred_element_type=jnp.float32) + b2_ref[...]
    h2 = jnp.maximum(h2, 0.0).astype(w3_ref.dtype)

    # Layer 3: Linear (Q-values / logits); padded rows of w3 are zero
    out = jnp.dot(h2, w3_ref[...], preferred_element_type=jnp.float32) + b3_ref[...]
    o_ref[...] = out.astype(o_ref.dtype)


def prepare_params(params, compute_dtype=jnp.bfloat16):
    """One-time parameter prep: transpose to (in, out), cast to compute dtype,
    reshape biases to (1, out), and zero-pad H2 (64 -> 128) for lane density."""
    action_size = params["w3"].shape[0]

    w1t = jnp.asarray(params["w1"]).T.astype(compute_dtype)            # (in, 128)

    # Layer 2: pad the OUTPUT dim 64 -> 128 so h2 is lane-dense.
    w2t = jnp.zeros((_H1, _H2_PAD), compute_dtype).at[:, :_H2].set(
        jnp.asarray(params["w2"]).T.astype(compute_dtype))             # (128, 128)
    # Layer 3: pad the INPUT dim 64 -> 128 with zeros (matches padded h2 lanes).
    w3t = jnp.zeros((_H2_PAD, action_size), compute_dtype).at[:_H2, :].set(
        jnp.asarray(params["w3"]).T.astype(compute_dtype))             # (128, A)

    b1 = jnp.asarray(params["b1"]).reshape(1, _H1).astype(jnp.float32)
    b2 = jnp.zeros((1, _H2_PAD), jnp.float32).at[:, :_H2].set(
        jnp.asarray(params["b2"]).astype(jnp.float32))
    b3 = jnp.asarray(params["b3"]).reshape(1, action_size).astype(jnp.float32)

    return {"w1t": w1t, "b1": b1, "w2t": w2t, "b2": b2, "w3t": w3t, "b3": b3,
            "action_size": action_size, "compute_dtype": compute_dtype}


def poker_ai_forward(x, prepared, *, block_b=2048, min_grid_steps=4):
    """Run the PokerAIModel forward pass. x: (B, input_size) float32."""
    B, in_size = x.shape
    action_size = prepared["action_size"]

    # Batch tile: as large as block_b allows, but clamped so the grid keeps at
    # least `min_grid_steps` steps (feeds both v7x TensorCores); always a
    # multiple of the f32 sublane count.
    tb = min(block_b, max(_SUBLANE, _round_up(pl.cdiv(B, min_grid_steps), _SUBLANE)))
    grid = (pl.cdiv(B, tb),)   # boundary block handled by Pallas masking

    dsize = jnp.dtype(prepared["compute_dtype"]).itemsize
    weight_elems = in_size * _H1 + _H1 * _H2_PAD + _H2_PAD * action_size
    flops = int(2 * B * weight_elems)
    bytes_accessed = int(B * in_size * 4                      # x read (f32)
                         + weight_elems * dsize               # resident weights
                         + (_H1 + _H2_PAD + action_size) * 4  # biases
                         + B * action_size * 4)               # output (unpadded)

    # Only very large tiles need a raised scoped-VMEM limit (v5e default 16 MiB).
    vmem_limit = 64 * 1024 * 1024 if tb >= 4096 else None

    out = pl.pallas_call(
        _mlp_kernel,
        out_shape=jax.ShapeDtypeStruct((B, action_size), jnp.float32),
        grid=grid,
        in_specs=[
            pl.BlockSpec((tb, in_size), lambda i: (i, 0)),          # x: batch-tiled
            pl.BlockSpec(prepared["w1t"].shape, lambda i: (0, 0)),  # VMEM-resident
            pl.BlockSpec(prepared["b1"].shape, lambda i: (0, 0)),
            pl.BlockSpec(prepared["w2t"].shape, lambda i: (0, 0)),
            pl.BlockSpec(prepared["b2"].shape, lambda i: (0, 0)),
            pl.BlockSpec(prepared["w3t"].shape, lambda i: (0, 0)),
            pl.BlockSpec(prepared["b3"].shape, lambda i: (0, 0)),
        ],
        out_specs=pl.BlockSpec((tb, action_size), lambda i: (i, 0)),  # unpadded head
        compiler_params=pltpu.CompilerParams(
            dimension_semantics=("parallel",),                        # megacore on v7x
            vmem_limit_bytes=vmem_limit),
        cost_estimate=pl.CostEstimate(
            flops=flops, transcendentals=0, bytes_accessed=bytes_accessed),
    )(x, prepared["w1t"], prepared["b1"], prepared["w2t"], prepared["b2"],
      prepared["w3t"], prepared["b3"])

    return out


def init_params(key, input_size, action_size):
    """Deterministic synthetic init matching PyTorch Linear parameter shapes."""
    ks = jax.random.split(key, 6)

    def uniform_init(k, shape, fan_in):
        bound = 1.0 / jnp.sqrt(fan_in)
        return jax.random.uniform(k, shape, jnp.float32, -bound, bound)

    return {
        "w1": uniform_init(ks[0], (_H1, input_size), input_size),
        "b1": uniform_init(ks[1], (_H1,), input_size),
        "w2": uniform_init(ks[2], (_H2, _H1), _H1),
        "b2": uniform_init(ks[3], (_H2,), _H1),
        "w3": uniform_init(ks[4], (action_size, _H2), _H2),
        "b3": uniform_init(ks[5], (action_size,), _H2),
    }


def _reference_forward(x, params):
    """Pure-JAX f32 reference mirroring the PyTorch forward semantics."""
    h1 = jnp.maximum(x @ params["w1"].T + params["b1"], 0.0)
    h2 = jnp.maximum(h1 @ params["w2"].T + params["b2"], 0.0)
    return h2 @ params["w3"].T + params["b3"]


# TODO(synk): predict()/update() (tensor construction, Q-learning target, MSE loss,
# optimizer step) are host-side training utilities, not part of the forward pass.

if __name__ == "__main__":
    key = jax.random.PRNGKey(0)
    k_x, k_p = jax.random.split(key)

    batch = 2
    input_size = 32   # game-state feature vector size
    action_size = 8   # number of poker actions

    x = jax.random.normal(k_x, (batch, input_size), dtype=jnp.float32)
    params = init_params(k_p, input_size, action_size)

    prepared = prepare_params(params)           # one-time weight prep
    out = poker_ai_forward(x, prepared)
    out = jax.block_until_ready(out)

    ref = _reference_forward(x, params)
    assert out.shape == (batch, action_size)
    # bf16 MXU path with f32 accumulation: loosened tolerance vs f32 reference.
    assert jnp.allclose(out, ref, atol=5e-2, rtol=5e-2), "mismatch vs reference"

    print("KERNEL_OK")
</pallas_src>

<mosaic_0001>
module attributes {stable_mosaic.version = 11 : i64} {
  func.func @_mlp_kernel(%arg0: i32, %arg1: memref<8x32xf32, #tpu.memory_space<vmem>>, %arg2: memref<32x128xbf16, #tpu.memory_space<vmem>>, %arg3: memref<1x128xf32, #tpu.memory_space<vmem>>, %arg4: memref<128x128xbf16, #tpu.memory_space<vmem>>, %arg5: memref<1x128xf32, #tpu.memory_space<vmem>>, %arg6: memref<128x8xbf16, #tpu.memory_space<vmem>>, %arg7: memref<1x8xf32, #tpu.memory_space<vmem>>, %arg8: memref<8x8xf32, #tpu.memory_space<vmem>>) attributes {dimension_semantics = [#tpu.dimension_semantics<parallel>], iteration_bounds = array<i64: 1>, scalar_prefetch = 0 : i64, scratch_operands = 0 : i64, tpu.core_type = #tpu.core_type<tc>, window_params = [{transform_indices = @transform_0, window_bounds = array<i64: 8, 32>}, {pipeline_mode = #tpu.pipeline_mode<synchronous>, transform_indices = @transform_1, window_bounds = array<i64: 32, 128>}, {pipeline_mode = #tpu.pipeline_mode<synchronous>, transform_indices = @transform_2, window_bounds = array<i64: 1, 128>}, {pipeline_mode = #tpu.pipeline_mode<synchronous>, transform_indices = @transform_3, window_bounds = array<i64: 128, 128>}, {pipeline_mode = #tpu.pipeline_mode<synchronous>, transform_indices = @transform_4, window_bounds = array<i64: 1, 128>}, {pipeline_mode = #tpu.pipeline_mode<synchronous>, transform_indices = @transform_5, window_bounds = array<i64: 128, 8>}, {pipeline_mode = #tpu.pipeline_mode<synchronous>, transform_indices = @transform_6, window_bounds = array<i64: 1, 8>}, {transform_indices = @transform_7, window_bounds = array<i64: 8, 8>}]} {
    %c0 = arith.constant 0 : index
    %c0_0 = arith.constant 0 : index
    %0 = vector.load %arg1[%c0, %c0_0] : memref<8x32xf32, #tpu.memory_space<vmem>>, vector<8x32xf32>
    %1 = arith.truncf %0 : vector<8x32xf32> to vector<8x32xbf16>
    %c0_1 = arith.constant 0 : index
    %c0_2 = arith.constant 0 : index
    %2 = vector.load %arg2[%c0_1, %c0_2] : memref<32x128xbf16, #tpu.memory_space<vmem>>, vector<32x128xbf16>
    %cst = arith.constant dense<0.000000e+00> : vector<8x128xf32>
    %3 = tpu.matmul %1, %2, %cst {dimension_numbers = #tpu.dot_dimension_numbers<[1], [0], [0], [1], [0, 0, 1, 1], [], []>} : vector<8x32xbf16>, vector<32x128xbf16>, vector<8x128xf32> -> vector<8x128xf32>
    %c0_3 = arith.constant 0 : index
    %c0_4 = arith.constant 0 : index
    %4 = vector.load %arg3[%c0_3, %c0_4] : memref<1x128xf32, #tpu.memory_space<vmem>>, vector<1x128xf32>
    %5 = vector.broadcast %4 : vector<1x128xf32> to vector<8x128xf32>
    %6 = arith.addf %3, %5 : vector<8x128xf32>
    %cst_5 = arith.constant 0.000000e+00 : f32
    %7 = vector.broadcast %cst_5 : f32 to vector<8x128xf32>
    %8 = arith.maximumf %6, %7 : vector<8x128xf32>
    %9 = arith.truncf %8 : vector<8x128xf32> to vector<8x128xbf16>
    %c0_6 = arith.constant 0 : index
    %c0_7 = arith.constant 0 : index
    %10 = vector.load %arg4[%c0_6, %c0_7] : memref<128x128xbf16, #tpu.memory_space<vmem>>, vector<128x128xbf16>
    %cst_8 = arith.constant dense<0.000000e+00> : vector<8x128xf32>
    %11 = tpu.matmul %9, %10, %cst_8 {dimension_numbers = #tpu.dot_dimension_numbers<[1], [0], [0], [1], [0, 0, 1, 1], [], []>} : vector<8x128xbf16>, vector<128x128xbf16>, vector<8x128xf32> -> vector<8x128xf32>
    %c0_9 = arith.constant 0 : index
    %c0_10 = arith.constant 0 : index
    %12 = vector.load %arg5[%c0_9, %c0_10] : memref<1x128xf32, #tpu.memory_space<vmem>>, vector<1x128xf32>
    %13 = vector.broadcast %12 : vector<1x128xf32> to vector<8x128xf32>
    %14 = arith.addf %11, %13 : vector<8x128xf32>
    %cst_11 = arith.constant 0.000000e+00 : f32
    %15 = vector.broadcast %cst_11 : f32 to vector<8x128xf32>
    %16 = arith.maximumf %14, %15 : vector<8x128xf32>
    %17 = arith.truncf %16 : vector<8x128xf32> to vector<8x128xbf16>
    %c0_12 = arith.constant 0 : index
    %c0_13 = arith.constant 0 : index
    %18 = vector.load %arg6[%c0_12, %c0_13] : memref<128x8xbf16, #tpu.memory_space<vmem>>, vector<128x8xbf16>
    %cst_14 = arith.constant dense<0.000000e+00> : vector<8x8xf32>
    %19 = tpu.matmul %17, %18, %cst_14 {dimension_numbers = #tpu.dot_dimension_numbers<[1], [0], [0], [1], [0, 0, 1, 1], [], []>} : vector<8x128xbf16>, vector<128x8xbf16>, vector<8x8xf32> -> vector<8x8xf32>
    %c0_15 = arith.constant 0 : index
    %c0_16 = arith.constant 0 : index
    %20 = vector.load %arg7[%c0_15, %c0_16] : memref<1x8xf32, #tpu.memory_space<vmem>>, vector<1x8xf32>
    %21 = vector.broadcast %20 : vector<1x8xf32> to vector<8x8xf32>
    %22 = arith.addf %19, %21 : vector<8x8xf32>
    %c0_17 = arith.constant 0 : index
    %c0_18 = arith.constant 0 : index
    %23 = vector.load %arg8[%c0_17, %c0_18] : memref<8x8xf32, #tpu.memory_space<vmem>>, vector<8x8xf32>
    tpu.vector_store %arg8[%c0_17, %c0_18], %22 {strides = array<i32>} : memref<8x8xf32, #tpu.memory_space<vmem>>, vector<8x8xf32>,
    return
  }
  func.func @transform_0(%arg0: i32) -> (i32, i32) {
    %c0_i32 = arith.constant 0 : i32
    %c0_i32_0 = arith.constant 0 : i32
    return %arg0, %c0_i32 : i32, i32
  }
  func.func @transform_1(%arg0: i32) -> (i32, i32) {
    %c0_i32 = arith.constant 0 : i32
    %c0_i32_0 = arith.constant 0 : i32
    %c0_i32_1 = arith.constant 0 : i32
    return %c0_i32, %c0_i32_0 : i32, i32
  }
  func.func @transform_2(%arg0: i32) -> (i32, i32) {
    %c0_i32 = arith.constant 0 : i32
    %c0_i32_0 = arith.constant 0 : i32
    %c0_i32_1 = arith.constant 0 : i32
    return %c0_i32, %c0_i32_0 : i32, i32
  }
  func.func @transform_3(%arg0: i32) -> (i32, i32) {
    %c0_i32 = arith.constant 0 : i32
    %c0_i32_0 = arith.constant 0 : i32
    %c0_i32_1 = arith.constant 0 : i32
    return %c0_i32, %c0_i32_0 : i32, i32
  }
  func.func @transform_4(%arg0: i32) -> (i32, i32) {
    %c0_i32 = arith.constant 0 : i32
    %c0_i32_0 = arith.constant 0 : i32
    %c0_i32_1 = arith.constant 0 : i32
    return %c0_i32, %c0_i32_0 : i32, i32
  }
  func.func @transform_5(%arg0: i32) -> (i32, i32) {
    %c0_i32 = arith.constant 0 : i32
    %c0_i32_0 = arith.constant 0 : i32
    %c0_i32_1 = arith.constant 0 : i32
    return %c0_i32, %c0_i32_0 : i32, i32
  }
  func.func @transform_6(%arg0: i32) -> (i32, i32) {
    %c0_i32 = arith.constant 0 : i32
    %c0_i32_0 = arith.constant 0 : i32
    %c0_i32_1 = arith.constant 0 : i32
    return %c0_i32, %c0_i32_0 : i32, i32
  }
  func.func @transform_7(%arg0: i32) -> (i32, i32) {
    %c0_i32 = arith.constant 0 : i32
    %c0_i32_0 = arith.constant 0 : i32
    return %arg0, %c0_i32 : i32, i32
  }
}

</mosaic_0001>

<llo_original>
// kernel: tpu_custom_call.1
$region0: #{tpu_custom_call.1}
  #allocation0 [shape = 'u32[]', space=smem, size = 0x4, offset = 0x4, fixed_abs, tag = 'smem constant byte address 0x4 - core index']
  #allocation1 [shape = 'u32[72,128]{1,0:T(1,128)}', space=vmem, size = 0x9000, scoped, tag = 'internal scratch']
  %s0 = inlined_call_operand.vmem [shape: f32[2,32], index: 0, kind: input, shape index: {}]
  %s1 = inlined_call_operand.hbm [shape: bf16[32,128], index: 1, kind: input, shape index: {}]
  %s2 = inlined_call_operand.vmem [shape: f32[1,128], index: 2, kind: input, shape index: {}]
  %s3 = inlined_call_operand.vmem [shape: bf16[128,128], index: 3, kind: input, shape index: {}]
  %s4 = inlined_call_operand.vmem [shape: f32[1,128], index: 4, kind: input, shape index: {}]
  %s5 = inlined_call_operand.vmem [shape: bf16[128,8], index: 5, kind: input, shape index: {}]
  %s6 = inlined_call_operand.vmem [shape: f32[1,8], index: 6, kind: input, shape index: {}]
  %s7 = inlined_call_operand.hbm [shape: f32[2,8], index: 7, kind: output, shape index: {}]
  %s8 = sld [smem:[#allocation0]]
  $region42: #{tpu_custom_call.1} parent=0
    _
  %s10 = ssub.s32 1, %s8
  %s11 = scalar_select 0, %s10, %s8
  $region1: #{tpu_custom_call.1} parent=0
    #allocation2 [shape = 'u8[8192]{0}', space=vmem, size = 0x2000, scoped, tag = 'input window, operand 1, single buffered']
    #allocation3 [shape = 's32[1]{0}', space=sflag, size = 0x4, scoped, tag = 'scoped memory for tpu_custom_call.1']
    #allocation4 [shape = 's32[1]{0}', space=sflag, size = 0x4, scoped, tag = 'scoped memory for tpu_custom_call.1']
    #allocation5 [shape = 'u8[4096]{0}', space=vmem, size = 0x1000, scoped, tag = 'output window, operand 0, single buffered']
    %12 = vsyncpa [#allocation3], 0
    %13 = vsyncpa [#allocation4], 0
    // Predicated region
    $region2: #{tpu_custom_call.1} parent=1 // pred_check
      _
    $region3: #{tpu_custom_call.1} parent=1 // pred_check_branch
      %15 = sbr.rel (0) target = $region5
    $region4: #{tpu_custom_call.1} parent=1 // pred_region
      _
    $region5: #{tpu_custom_call.1} parent=1 // pred_fallthru
      _
    // Predicated region
    $region6: #{tpu_custom_call.1} parent=1 // pred_check
      _
    $region7: #{tpu_custom_call.1} parent=1 // pred_check_branch
      %17 = sbr.rel (0) target = $region9
    $region8: #{tpu_custom_call.1} parent=1 // pred_region
      %19 = vsyncadd [#allocation3], 0
      %s20 = sshll.u32 %s1, 4
      %s21 = int_to_ptr.hbm [resolvable:$true] %s20
      %s22 = sshll.u32 [#allocation2], 4
      %s23 = int_to_ptr.vmem [resolvable:$true] %s22
      %28 = dma.hbm_to_vmem [thread:$0]  %s21, 256, %s23, [#allocation3], 64, 64, 4
    $region9: #{tpu_custom_call.1} parent=1 // pred_fallthru
      _
    // Predicated region
    $region10: #{tpu_custom_call.1} parent=1 // pred_check
      _
    $region11: #{tpu_custom_call.1} parent=1 // pred_check_branch
      %30 = sbr.rel (0) target = $region13
    $region12: #{tpu_custom_call.1} parent=1 // pred_region
      _
    $region13: #{tpu_custom_call.1} parent=1 // pred_fallthru
      _
    // Predicated region
    $region14: #{tpu_custom_call.1} parent=1 // pred_check
      _
    $region15: #{tpu_custom_call.1} parent=1 // pred_check_branch
      %32 = sbr.rel (0) target = $region17
    $region16: #{tpu_custom_call.1} parent=1 // pred_region
      _
    $region17: #{tpu_custom_call.1} parent=1 // pred_fallthru
      _
    // Predicated region
    $region18: #{tpu_custom_call.1} parent=1 // pred_check
      _
    $region19: #{tpu_custom_call.1} parent=1 // pred_check_branch
      %34 = sbr.rel (0) target = $region21
    $region20: #{tpu_custom_call.1} parent=1 // pred_region
      _
    $region21: #{tpu_custom_call.1} parent=1 // pred_fallthru
      _
    // Predicated region
    $region22: #{tpu_custom_call.1} parent=1 // pred_check
      _
    $region23: #{tpu_custom_call.1} parent=1 // pred_check_branch
      %36 = sbr.rel (0) target = $region25
    $region24: #{tpu_custom_call.1} parent=1 // pred_region
      _
    $region25: #{tpu_custom_call.1} parent=1 // pred_fallthru
      _
    // Predicated region
    $region26: #{tpu_custom_call.1} parent=1 // pred_check
      _
    $region27: #{tpu_custom_call.1} parent=1 // pred_check_branch
      %38 = sbr.rel (0) target = $region29
    $region28: #{tpu_custom_call.1} parent=1 // pred_region
      _
    $region29: #{tpu_custom_call.1} parent=1 // pred_fallthru
      _
    // Predicated region
    $region30: #{tpu_custom_call.1} parent=1 // pred_check
      _
    $region31: #{tpu_custom_call.1} parent=1 // pred_check_branch
      %40 = sbr.rel (0) target = $region33
    $region32: #{tpu_custom_call.1} parent=1 // pred_region
      %42 = dma.done [#allocation3], 256
    $region33: #{tpu_custom_call.1} parent=1 // pred_fallthru
      _
    %v44 = vld [vmem:[%s0] sm:$0xff]
    %v45 = vpack.c.bf16 %v44, %v44
    %v46 = vld [vmem:[#allocation2] sm:$0xf]
    %v47 = vld [vmem:[#allocation2 + $0x4] sm:$0xf]
    %v48 = vld [vmem:[#allocation2 + $0x8] sm:$0xf]
    %v49 = vld [vmem:[#allocation2 + $0xc] sm:$0xf]
    %v50 = vld [vmem:[%s2] sm:$0x1]
    %v52 = vperm.slane %v50, 0
    %v58 = vunpack.c.l.b16 %v46
    %v59 = vunpack.c.l.b16 %v47
    %v60 = vunpack.c.l.b16 %v48
    %v61 = vunpack.c.l.b16 %v49
    %v62 = vpack.c.b16 %v59, %v58
    %v63 = vpack.c.b16 %v61, %v60
    %vm66 = vcmask 261120
    %v68 = vsel %vm66, %v45, 0
    %70 = vmatpush.bf16.msra.mxu0 0
    %71 = vmatpush.bf16.msra.mxu0 0
    %72 = vmatpush.bf16.msra.mxu0 0
    %73 = vmatpush.bf16.msra.mxu0 0
    %74 = vmatpush.bf16.msra.mxu0 0
    %75 = vmatpush.bf16.msra.mxu0 0
    %76 = vmatpush.bf16.msra.mxu0 %v63
    %77 = vmatpush.bf16.msra.mxu0 %v62
    %78 = vmatmul.bf16.gmra.mxu0 %v68
    %v79 = vpop.f32.mrf.mxu0
    %v80 = vadd.f32 %v52, %v79
    %v81 = vpop.f32.mrf.mxu0
    %82 = vdwg.mxu0
    %v83 = vmax.f32 %v80, 0.0
    %v84 = vpack.c.bf16 %v83, %v83
    %v85 = vld [vmem:[%s3] sm:$0xf]
    %v86 = vld [vmem:[%s3 + $0x4] sm:$0xf]
    %v87 = vld [vmem:[%s3 + $0x8] sm:$0xf]
    %v88 = vld [vmem:[%s3 + $0xc] sm:$0xf]
    %v89 = vld [vmem:[%s3 + $0x10] sm:$0xf]
    %v90 = vld [vmem:[%s3 + $0x14] sm:$0xf]
    %v91 = vld [vmem:[%s3 + $0x18] sm:$0xf]
    %v92 = vld [vmem:[%s3 + $0x1c] sm:$0xf]
    %v93 = vld [vmem:[%s3 + $0x20] sm:$0xf]
    %v94 = vld [vmem:[%s3 + $0x24] sm:$0xf]
    %v95 = vld [vmem:[%s3 + $0x28] sm:$0xf]
    %v96 = vld [vmem:[%s3 + $0x2c] sm:$0xf]
    %v97 = vld [vmem:[%s3 + $0x30] sm:$0xf]
    %v98 = vld [vmem:[%s3 + $0x34] sm:$0xf]
    %v99 = vld [vmem:[%s3 + $0x38] sm:$0xf]
    %v100 = vld [vmem:[%s3 + $0x3c] sm:$0xf]
    %v101 = vld [vmem:[%s4] sm:$0x1]
    %v103 = vperm.slane %v101, 0
    %v121 = vunpack.c.l.b16 %v85
    %v122 = vunpack.c.l.b16 %v86
    %v123 = vunpack.c.l.b16 %v87
    %v124 = vunpack.c.l.b16 %v88
    %v125 = vunpack.c.l.b16 %v89
    %v126 = vunpack.c.l.b16 %v90
    %v127 = vunpack.c.l.b16 %v91
    %v128 = vunpack.c.l.b16 %v92
    %v129 = vunpack.c.l.b16 %v93
    %v130 = vunpack.c.l.b16 %v94
    %v131 = vunpack.c.l.b16 %v95
    %v132 = vunpack.c.l.b16 %v96
    %v133 = vunpack.c.l.b16 %v97
    %v134 = vunpack.c.l.b16 %v98
    %v135 = vunpack.c.l.b16 %v99
    %v136 = vunpack.c.l.b16 %v100
    %v137 = vpack.c.b16 %v122, %v121
    %v138 = vpack.c.b16 %v124, %v123
    %v139 = vpack.c.b16 %v126, %v125
    %v140 = vpack.c.b16 %v128, %v127
    %v141 = vpack.c.b16 %v130, %v129
    %v142 = vpack.c.b16 %v132, %v131
    %v143 = vpack.c.b16 %v134, %v133
    %v144 = vpack.c.b16 %v136, %v135
    %153 = vmatpush.bf16.msra.mxu0 %v144
    %154 = vmatpush.bf16.msra.mxu0 %v143
    %155 = vmatpush.bf16.msra.mxu0 %v142
    %156 = vmatpush.bf16.msra.mxu0 %v141
    %157 = vmatpush.bf16.msra.mxu0 %v140
    %158 = vmatpush.bf16.msra.mxu0 %v139
    %159 = vmatpush.bf16.msra.mxu0 %v138
    %160 = vmatpush.bf16.msra.mxu0 %v137
    %161 = vmatmul.bf16.gmra.mxu0 %v84
    %v162 = vpop.f32.mrf.mxu0
    %v163 = vadd.f32 %v103, %v162
    %v164 = vpop.f32.mrf.mxu0
    %165 = vdwg.mxu0
    %v166 = vmax.f32 %v163, 0.0
    %v167 = vpack.c.bf16 %v166, %v166
    %v168 = vld [vmem:[%s5] sm:$0xf]
    %v169 = vld [vmem:[%s5 + $0x4] sm:$0xf]
    %v170 = vld [vmem:[%s5 + $0x8] sm:$0xf]
    %v171 = vld [vmem:[%s5 + $0xc] sm:$0xf]
    %v172 = vld [vmem:[%s5 + $0x10] sm:$0xf]
    %v173 = vld [vmem:[%s5 + $0x14] sm:$0xf]
    %v174 = vld [vmem:[%s5 + $0x18] sm:$0xf]
    %v175 = vld [vmem:[%s5 + $0x1c] sm:$0xf]
    %v176 = vld [vmem:[%s5 + $0x20] sm:$0xf]
    %v177 = vld [vmem:[%s5 + $0x24] sm:$0xf]
    %v178 = vld [vmem:[%s5 + $0x28] sm:$0xf]
    %v179 = vld [vmem:[%s5 + $0x2c] sm:$0xf]
    %v180 = vld [vmem:[%s5 + $0x30] sm:$0xf]
    %v181 = vld [vmem:[%s5 + $0x34] sm:$0xf]
    %v182 = vld [vmem:[%s5 + $0x38] sm:$0xf]
    %v183 = vld [vmem:[%s5 + $0x3c] sm:$0xf]
    %v184 = vld [vmem:[%s6] sm:$0x1]
    %v186 = vperm.slane %v184, 0
    %v204 = vunpack.c.l.b16 %v168
    %v205 = vunpack.c.l.b16 %v169
    %v206 = vunpack.c.l.b16 %v170
    %v207 = vunpack.c.l.b16 %v171
    %v208 = vunpack.c.l.b16 %v172
    %v209 = vunpack.c.l.b16 %v173
    %v210 = vunpack.c.l.b16 %v174
    %v211 = vunpack.c.l.b16 %v175
    %v212 = vunpack.c.l.b16 %v176
    %v213 = vunpack.c.l.b16 %v177
    %v214 = vunpack.c.l.b16 %v178
    %v215 = vunpack.c.l.b16 %v179
    %v216 = vunpack.c.l.b16 %v180
    %v217 = vunpack.c.l.b16 %v181
    %v218 = vunpack.c.l.b16 %v182
    %v219 = vunpack.c.l.b16 %v183
    %v220 = vpack.c.b16 %v205, %v204
    %v221 = vpack.c.b16 %v207, %v206
    %v222 = vpack.c.b16 %v209, %v208
    %v223 = vpack.c.b16 %v211, %v210
    %v224 = vpack.c.b16 %v213, %v212
    %v225 = vpack.c.b16 %v215, %v214
    %v226 = vpack.c.b16 %v217, %v216
    %v227 = vpack.c.b16 %v219, %v218
    %236 = vmatpush.bf16.msra.mxu0 %v227
    %237 = vmatpush.bf16.msra.mxu0 %v226
    %238 = vmatpush.bf16.msra.mxu0 %v225
    %239 = vmatpush.bf16.msra.mxu0 %v224
    %240 = vmatpush.bf16.msra.mxu0 %v223
    %241 = vmatpush.bf16.msra.mxu0 %v222
    %242 = vmatpush.bf16.msra.mxu0 %v221
    %243 = vmatpush.bf16.msra.mxu0 %v220
    %244 = vmatmul.bf16.gmra.mxu0 %v167
    %v245 = vpop.f32.mrf.mxu0
    %v246 = vadd.f32 %v186, %v245
    %v247 = vpop.f32.mrf.mxu0
    %248 = vdwg.mxu0
    %vm249 = vcmask 64512
    %250 = vst.msk [vmem:[#allocation5] sm:$0xff] %vm249, %v246
    // Predicated region
    $region34: #{tpu_custom_call.1} parent=1 // pred_check
      _
    $region35: #{tpu_custom_call.1} parent=1 // pred_check_branch
      %252 = sbr.rel (0) target = $region37
    $region36: #{tpu_custom_call.1} parent=1 // pred_region
      %254 = vsyncadd [#allocation4], 96
      %s255 = sshll.u32 [#allocation5], 4
      %s256 = int_to_ptr.vmem [resolvable:$true] %s255
      %s257 = sshll.u32 %s7, 4
      %s258 = int_to_ptr.hbm [resolvable:$true] %s257
      %263 = dma.vmem_to_hbm [thread:$0]  %s256, 32, %s258, [#allocation4], 32, 32, 2
    $region37: #{tpu_custom_call.1} parent=1 // pred_fallthru
      _
    // Predicated region
    $region38: #{tpu_custom_call.1} parent=1 // pred_check
      _
    $region39: #{tpu_custom_call.1} parent=1 // pred_check_branch
      %265 = sbr.rel (0) target = $region41
    $region40: #{tpu_custom_call.1} parent=1 // pred_region
      %267 = dma.done [#allocation4], 128
    $region41: #{tpu_custom_call.1} parent=1 // pred_fallthru
      _
    %268 = vsyncpa [#allocation3], 1
    %269 = vsyncpa [#allocation4], 1

</llo_original>
